<compile_context>
chip_gen: v5e
topology: v5e:2x2
jax: 0.10.0
libtpu: 0.0.40
codegen_flags: <defaults>
</compile_context>

<pallas_src>
import functools

import jax
import jax.numpy as jnp
from jax.experimental import pallas as pl
from jax.experimental.pallas import tpu as pltpu


def _monomial_kernel(x_ref, o_ref, *, coeff, exponent):
    """Elementwise  coeff * x**exponent  on one VMEM tile (VPU work only)."""
    x = x_ref[...]

    # Square-and-multiply: ~2*log2(exponent) multiplies instead of exponent-1.
    # `exponent` is a static Python int >= 1 here (0 / negative handled in wrapper).
    result = None
    base = x
    e = exponent
    while e > 0:
        if e & 1:
            result = base if result is None else result * base
        e >>= 1
        if e:
            base = base * base
    y = result

    if coeff != 1.0:
        # Keep compute in the native dtype (bf16 stays bf16 on v6e/v7x).
        y = y * jnp.asarray(coeff, dtype=y.dtype)

    o_ref[...] = y.astype(o_ref.dtype)


def monomial(x, degree, derivative=0, *, lanes=1024, target_block_rows=512):
    """Pallas equivalent of Monomial(degree).forward(x, derivative).

    x: any-shaped array (module uses (nbatch, dim)).
    degree, derivative: static Python ints.
    """
    if derivative == 0:
        coeff, exponent = 1.0, degree
    elif derivative == 1:
        coeff, exponent = float(degree), degree - 1
    elif derivative == 2:
        coeff, exponent = float(degree * (degree - 1)), degree - 2
    else:
        raise ValueError("derivative must be 0, 1 or 2")

    # --- constant / zero short-circuits: no HBM read, no kernel launch -------
    if coeff == 0.0:
        return jnp.zeros(x.shape, x.dtype)
    if exponent == 0:
        return jnp.full(x.shape, coeff, x.dtype)
    if exponent < 0:
        # Cannot happen for integer degree >= derivative with nonzero coeff,
        # but guard explicitly rather than silently returning garbage.
        raise ValueError(
            f"negative exponent {exponent} with nonzero coeff {coeff} is unsupported"
        )

    orig_shape = x.shape
    dtype = x.dtype
    n = x.size
    itemsize = jnp.dtype(dtype).itemsize

    # --- present a lane-dense slab: last dim = `lanes` (multiple of 128) -----
    flat = x.reshape(-1)
    n_rows = pl.cdiv(n, lanes)

    # Sublane packing: rows-per-vreg is 8 (f32) / 16 (bf16) / 32 (int8).
    pack = max(8, 32 // itemsize)
    block_rows = min(target_block_rows, n_rows)
    block_rows = pl.cdiv(block_rows, pack) * pack          # multiple of pack
    n_rows_padded = pl.cdiv(n_rows, block_rows) * block_rows
    n_padded = n_rows_padded * lanes

    if n_padded != n:
        # Zero padding is safe: 0**e == 0 for e >= 1; padded region is sliced off.
        flat = jnp.pad(flat, (0, n_padded - n))
    slab = flat.reshape(n_rows_padded, lanes)

    grid = (n_rows_padded // block_rows,)
    tile_bytes = block_rows * lanes * itemsize
    # Double-buffered input + output tiles (+ headroom); keep below v7x's 64 MiB.
    vmem_limit = int(min(max(4 * tile_bytes + (2 << 20), 16 << 20), 64 << 20))

    kernel = functools.partial(_monomial_kernel, coeff=coeff, exponent=exponent)

    out = pl.pallas_call(
        kernel,
        out_shape=jax.ShapeDtypeStruct((n_rows_padded, lanes), dtype),
        grid_spec=pltpu.PrefetchScalarGridSpec(
            num_scalar_prefetch=0,
            grid=grid,
            in_specs=[pl.BlockSpec((block_rows, lanes), lambda i: (i, 0))],
            out_specs=pl.BlockSpec((block_rows, lanes), lambda i: (i, 0)),
        ),
        compiler_params=pltpu.CompilerParams(
            dimension_semantics=("parallel",),
            vmem_limit_bytes=vmem_limit,
        ),
    )(slab)

    return out.reshape(-1)[:n].reshape(orig_shape)


if __name__ == "__main__":
    key = jax.random.PRNGKey(0)
    nbatch, dim = 16, 32
    x = jax.random.normal(key, (nbatch, dim), dtype=jnp.float32)

    degree = 3
    # forward, first and second derivatives
    y0 = jax.block_until_ready(monomial(x, degree, derivative=0))
    y1 = jax.block_until_ready(monomial(x, degree, derivative=1))
    y2 = jax.block_until_ready(monomial(x, degree, derivative=2))

    ref0 = jnp.power(x, degree)
    ref1 = degree * jnp.power(x, degree - 1)
    ref2 = degree * (degree - 1) * jnp.power(x, degree - 2)
    assert jnp.allclose(y0, ref0, rtol=1e-5, atol=1e-5)
    assert jnp.allclose(y1, ref1, rtol=1e-5, atol=1e-5)
    assert jnp.allclose(y2, ref2, rtol=1e-5, atol=1e-5)

    # constant case (degree==derivative==2): short-circuits, no kernel launch
    yc = jax.block_until_ready(monomial(x, 2, derivative=2))
    assert jnp.allclose(yc, jnp.full_like(x, 2.0))
    # zero case (degree=1, derivative=2): coeff == 0
    yz = jax.block_until_ready(monomial(x, 1, derivative=2))
    assert jnp.allclose(yz, jnp.zeros_like(x))
    # higher degree exercises square-and-multiply
    y7 = jax.block_until_ready(monomial(x, 7, derivative=1))
    assert jnp.allclose(y7, 7.0 * jnp.power(x, 6), rtol=1e-4, atol=1e-4)

    print("KERNEL_OK")
</pallas_src>

<mosaic_0001>
module attributes {stable_mosaic.version = 11 : i64} {
  func.func @_monomial_kernel(%arg0: i32, %arg1: memref<8x1024xf32, #tpu.memory_space<vmem>>, %arg2: memref<8x1024xf32, #tpu.memory_space<vmem>>) attributes {dimension_semantics = [#tpu.dimension_semantics<parallel>], iteration_bounds = array<i64: 1>, scalar_prefetch = 0 : i64, scratch_operands = 0 : i64, tpu.core_type = #tpu.core_type<tc>, window_params = [{transform_indices = @transform_0, window_bounds = array<i64: 8, 1024>}, {transform_indices = @transform_1, window_bounds = array<i64: 8, 1024>}]} {
    %c0 = arith.constant 0 : index
    %c0_0 = arith.constant 0 : index
    %0 = vector.load %arg1[%c0, %c0_0] : memref<8x1024xf32, #tpu.memory_space<vmem>>, vector<8x1024xf32>
    %1 = arith.mulf %0, %0 : vector<8x1024xf32>
    %2 = arith.mulf %0, %1 : vector<8x1024xf32>
    %c0_1 = arith.constant 0 : index
    %c0_2 = arith.constant 0 : index
    %3 = vector.load %arg2[%c0_1, %c0_2] : memref<8x1024xf32, #tpu.memory_space<vmem>>, vector<8x1024xf32>
    tpu.vector_store %arg2[%c0_1, %c0_2], %2 {strides = array<i32>} : memref<8x1024xf32, #tpu.memory_space<vmem>>, vector<8x1024xf32>,
    return
  }
  func.func @transform_0(%arg0: i32) -> (i32, i32) {
    %c0_i32 = arith.constant 0 : i32
    %c0_i32_0 = arith.constant 0 : i32
    return %arg0, %c0_i32 : i32, i32
  }
  func.func @transform_1(%arg0: i32) -> (i32, i32) {
    %c0_i32 = arith.constant 0 : i32
    %c0_i32_0 = arith.constant 0 : i32
    return %arg0, %c0_i32 : i32, i32
  }
}

</mosaic_0001>

<llo_original>
// kernel: tpu_custom_call.1
$region0: #{tpu_custom_call.1}
  #allocation0 [shape = 'u32[]', space=smem, size = 0x4, offset = 0x4, fixed_abs, tag = 'smem constant byte address 0x4 - core index']
  #allocation1 [shape = 'u32[72,128]{1,0:T(1,128)}', space=vmem, size = 0x9000, scoped, tag = 'internal scratch']
  %s0 = inlined_call_operand.hbm [shape: f32[8,1024], index: 0, kind: input, shape index: {}]
  %s1 = inlined_call_operand.hbm [shape: f32[8,1024], index: 1, kind: output, shape index: {}]
  %s2 = sld [smem:[#allocation0]]
  $region18: #{tpu_custom_call.1} parent=0
    _
  %s4 = ssub.s32 1, %s2
  %s5 = scalar_select 0, %s4, %s2
  $region1: #{tpu_custom_call.1} parent=0
    #allocation2 [shape = 'u8[32768]{0}', space=vmem, size = 0x8000, scoped, tag = 'input window, operand 0, single buffered']
    #allocation3 [shape = 's32[1]{0}', space=sflag, size = 0x4, scoped, tag = 'scoped memory for tpu_custom_call.1']
    #allocation4 [shape = 's32[1]{0}', space=sflag, size = 0x4, scoped, tag = 'scoped memory for tpu_custom_call.1']
    #allocation5 [shape = 'u8[32768]{0}', space=vmem, size = 0x8000, scoped, tag = 'output window, operand 0, single buffered']
    %6 = vsyncpa [#allocation3], 0
    %7 = vsyncpa [#allocation4], 0
    // Predicated region
    $region2: #{tpu_custom_call.1} parent=1 // pred_check
      _
    $region3: #{tpu_custom_call.1} parent=1 // pred_check_branch
      %9 = sbr.rel (0) target = $region5
    $region4: #{tpu_custom_call.1} parent=1 // pred_region
      %11 = vsyncadd [#allocation3], 0
      %s13 = sshll.u32 %s0, 4
      %s14 = int_to_ptr.hbm [resolvable:$true] %s13
      %s15 = sshll.u32 [#allocation2], 4
      %s16 = int_to_ptr.vmem [resolvable:$true] %s15
      %18 = dma.hbm_to_vmem [thread:$0]  %s14, 1024, %s16, [#allocation3]
    $region5: #{tpu_custom_call.1} parent=1 // pred_fallthru
      _
    // Predicated region
    $region6: #{tpu_custom_call.1} parent=1 // pred_check
      _
    $region7: #{tpu_custom_call.1} parent=1 // pred_check_branch
      %20 = sbr.rel (0) target = $region9
    $region8: #{tpu_custom_call.1} parent=1 // pred_region
      %22 = dma.done [#allocation3], 1024
    $region9: #{tpu_custom_call.1} parent=1 // pred_fallthru
      _
    %v23 = vld [vmem:[#allocation2] sm:$0xff]
    %v24 = vld [vmem:[#allocation2 + $0x8] sm:$0xff]
    %v25 = vld [vmem:[#allocation2 + $0x10] sm:$0xff]
    %v26 = vld [vmem:[#allocation2 + $0x18] sm:$0xff]
    %v27 = vld [vmem:[#allocation2 + $0x20] sm:$0xff]
    %v28 = vld [vmem:[#allocation2 + $0x28] sm:$0xff]
    %v29 = vld [vmem:[#allocation2 + $0x30] sm:$0xff]
    %v30 = vld [vmem:[#allocation2 + $0x38] sm:$0xff]
    %v31 = vmul.f32 %v23, %v23
    %v32 = vmul.f32 %v24, %v24
    %v33 = vmul.f32 %v25, %v25
    %v34 = vmul.f32 %v26, %v26
    %v35 = vmul.f32 %v27, %v27
    %v36 = vmul.f32 %v28, %v28
    %v37 = vmul.f32 %v29, %v29
    %v38 = vmul.f32 %v30, %v30
    %v39 = vmul.f32 %v23, %v31
    %v40 = vmul.f32 %v24, %v32
    %v41 = vmul.f32 %v25, %v33
    %v42 = vmul.f32 %v26, %v34
    %v43 = vmul.f32 %v27, %v35
    %v44 = vmul.f32 %v28, %v36
    %v45 = vmul.f32 %v29, %v37
    %v46 = vmul.f32 %v30, %v38
    %47 = vst [vmem:[#allocation5] sm:$0xff] %v39
    %48 = vst [vmem:[#allocation5 + $0x8] sm:$0xff] %v40
    %49 = vst [vmem:[#allocation5 + $0x10] sm:$0xff] %v41
    %50 = vst [vmem:[#allocation5 + $0x18] sm:$0xff] %v42
    %51 = vst [vmem:[#allocation5 + $0x20] sm:$0xff] %v43
    %52 = vst [vmem:[#allocation5 + $0x28] sm:$0xff] %v44
    %53 = vst [vmem:[#allocation5 + $0x30] sm:$0xff] %v45
    %54 = vst [vmem:[#allocation5 + $0x38] sm:$0xff] %v46
    // Predicated region
    $region10: #{tpu_custom_call.1} parent=1 // pred_check
      _
    $region11: #{tpu_custom_call.1} parent=1 // pred_check_branch
      %56 = sbr.rel (0) target = $region13
    $region12: #{tpu_custom_call.1} parent=1 // pred_region
      %58 = vsyncadd [#allocation4], 0
      %s60 = sshll.u32 [#allocation5], 4
      %s61 = int_to_ptr.vmem [resolvable:$true] %s60
      %s62 = sshll.u32 %s1, 4
      %s63 = int_to_ptr.hbm [resolvable:$true] %s62
      %65 = dma.vmem_to_hbm [thread:$0]  %s61, 1024, %s63, [#allocation4]
    $region13: #{tpu_custom_call.1} parent=1 // pred_fallthru
      _
    // Predicated region
    $region14: #{tpu_custom_call.1} parent=1 // pred_check
      _
    $region15: #{tpu_custom_call.1} parent=1 // pred_check_branch
      %67 = sbr.rel (0) target = $region17
    $region16: #{tpu_custom_call.1} parent=1 // pred_region
      %69 = dma.done [#allocation4], 1024
    $region17: #{tpu_custom_call.1} parent=1 // pred_fallthru
      _
    %70 = vsyncpa [#allocation3], 1
    %71 = vsyncpa [#allocation4], 1

</llo_original>
